<compile_context>
chip_gen: v6e
topology: v6e:2x2x1
jax: 0.10.0
libtpu: 0.0.40
codegen_flags: <defaults>
</compile_context>

<pallas_src>
import functools

import jax
import jax.numpy as jnp
from jax.experimental import pallas as pl
from jax.experimental.pallas import tpu as pltpu

_GUMBEL_EPS = 1e-20


def _softmax_last(a):
    m = jnp.max(a, axis=-1, keepdims=True)
    e = jnp.exp(a - m)
    s = jnp.sum(e, axis=-1, keepdims=True)
    # EUP reciprocal instead of a VALU divide (effectively free next to the exp).
    return e * pl.reciprocal(s, approx=True)


# --------------------------- stage 1: q(y|x) + c = y @ W3_y + b3 ---------------------------
def _qyx_kernel(inv_temp,
                x2_ref, u_ref,
                w1_ref, b1_ref, w2_ref, b2_ref, wg_ref, bg_ref,
                w3y_ref, b3_ref,
                logits_ref, prob_ref, cat_ref, c_ref):
    f32 = jnp.float32
    x2 = x2_ref[...]                                                             # (B, N)
    h = jnp.maximum(jnp.dot(x2, w1_ref[...], preferred_element_type=f32) + b1_ref[...], 0.0)
    h = jnp.maximum(jnp.dot(h, w2_ref[...], preferred_element_type=f32) + b2_ref[...], 0.0)
    logits = jnp.dot(h, wg_ref[...], preferred_element_type=f32) + bg_ref[...]   # (B, Y)
    logits_ref[...] = logits
    prob_ref[...] = _softmax_last(logits)

    g = -jnp.log(-jnp.log(u_ref[...] + _GUMBEL_EPS) + _GUMBEL_EPS)               # Gumbel(0,1)
    y = _softmax_last((logits + g) * inv_temp)                                   # (B, Y)
    cat_ref[...] = y

    # y-dependent part of the first q(z|x,y) layer, broadcast over genes in stage 2.
    c_ref[...] = jnp.dot(y, w3y_ref[...], preferred_element_type=f32) + b3_ref[...]   # (B, Z)


# --------------------------- stage 2: q(z|x,y), lane-dense (Z, N) per batch ----------------
def _qz_kernel(x2_ref, c_ref, w3x_ref, w4t_ref, b4_ref, wmv_ref, bmv_ref,
               mu_ref, lv_ref):
    f32 = jnp.float32
    xb = x2_ref[0]                                        # (1, N)  genes on lanes
    cb = c_ref[0]                                         # (Z, 1)
    # First q(z) layer: x * (x-column of W3) + (y @ W3_y + b3), all 2-D broadcasts.
    h = jnp.maximum(w3x_ref[...] * xb + cb, 0.0)                                       # (Z, N)
    h = jnp.maximum(jnp.dot(w4t_ref[...], h, preferred_element_type=f32) + b4_ref[...], 0.0)
    # Fused mu / logvar heads: (2, Z) @ (Z, N) -> (2, N), lane-dense output.
    mv = jnp.dot(wmv_ref[...], h, preferred_element_type=f32) + bmv_ref[...]            # (2, N)
    mu_ref[0] = mv[0:1, :]
    lv_ref[0] = mv[1:2, :]


# --------------------------- stage 3: graph propagation + reparameterize -------------------
def _prop_kernel(B, stacked_ref, adj_ref, noise_ref, mean_ref, var_ref, z_ref):
    f32 = jnp.float32
    # One matmul: [mu; logvar] (2B, N) @ adj[:, col-block] (N, tc).  adj streams through VMEM.
    prop = jnp.dot(stacked_ref[...], adj_ref[...], preferred_element_type=f32)   # (2B, tc)
    mu = prop[0:B, :]
    lv = prop[B:2 * B, :]
    var = jnp.exp(lv)
    std = jnp.sqrt(var + 1e-10)          # keep the reference's +1e-10 under the sqrt
    mean_ref[...] = mu
    var_ref[...] = var
    z_ref[...] = mu + noise_ref[...] * std


def _pick_col_block(n):
    """Adj column-block width: lane-aligned (multiple of 128) slabs <= ~8 MiB so the
    HBM-bound graph matmul double-buffers instead of requiring a fully resident adj."""
    if n % 128 != 0:
        return n                          # small / irregular n_gene: single full-width block
    for c in (1024, 512, 256, 128):
        if n % c == 0 and n * c * 4 <= (8 << 20):
            return c
    return 128


def inference_net(x, adj, params, u_gumbel, noise, temperature=1.0):
    """x: (B, n_gene, 1) f32, adj: (n_gene, n_gene), u_gumbel: (B, y_dim) uniform,
    noise: (B, n_gene) standard normal. Returns the same dict as the PyTorch module."""
    B, n_gene, x_dim = x.shape
    assert x_dim == 1
    z_dim = params["w4t"].shape[0]
    y_dim = params["wg"].shape[1]
    f32 = jnp.float32

    x2 = x[:, :, 0]                                       # (B, n_gene), genes on lanes
    vmem = pl.BlockSpec(memory_space=pltpu.MemorySpace.VMEM)

    # ---- stage 1: q(y|x) ------------------------------------------------------------------
    # TODO(synk): for extremely large n_gene, K-tile the (B,N)@(N,Z) matmul so w1/x2 stream.
    logits, prob, cat, c = pl.pallas_call(
        functools.partial(_qyx_kernel, float(1.0 / temperature)),
        out_shape=(jax.ShapeDtypeStruct((B, y_dim), f32),
                   jax.ShapeDtypeStruct((B, y_dim), f32),
                   jax.ShapeDtypeStruct((B, y_dim), f32),
                   jax.ShapeDtypeStruct((B, z_dim), f32)),
        in_specs=[vmem] * 10,
        out_specs=(vmem, vmem, vmem, vmem),
    )(x2, u_gumbel,
      params["w1"], params["b1"], params["w2"], params["b2"],
      params["wg"], params["bg"], params["w3y"], params["b3"])

    # ---- stage 2: q(z|x,y), per-batch grid, lane-dense (Z, n_gene) activations -------------
    x2_3 = x2.reshape(B, 1, n_gene)        # free leading-dim reshapes (wrapper side)
    c3 = c.reshape(B, z_dim, 1)
    mu3, lv3 = pl.pallas_call(
        _qz_kernel,
        out_shape=(jax.ShapeDtypeStruct((B, 1, n_gene), f32),
                   jax.ShapeDtypeStruct((B, 1, n_gene), f32)),
        grid=(B,),
        in_specs=[
            pl.BlockSpec((1, 1, n_gene), lambda b: (b, 0, 0)),
            pl.BlockSpec((1, z_dim, 1), lambda b: (b, 0, 0)),
            pl.BlockSpec((z_dim, 1), lambda b: (0, 0)),
            pl.BlockSpec((z_dim, z_dim), lambda b: (0, 0)),
            pl.BlockSpec((z_dim, 1), lambda b: (0, 0)),
            pl.BlockSpec((2, z_dim), lambda b: (0, 0)),
            pl.BlockSpec((2, 1), lambda b: (0, 0)),
        ],
        out_specs=(pl.BlockSpec((1, 1, n_gene), lambda b: (b, 0, 0)),
                   pl.BlockSpec((1, 1, n_gene), lambda b: (b, 0, 0))),
        compiler_params=pltpu.CompilerParams(dimension_semantics=("parallel",)),
    )(x2_3, c3, params["w3x"], params["w4t"], params["b4"], params["wmv"], params["bmv"])

    mu_ori = mu3.reshape(B, n_gene)
    logvar = lv3.reshape(B, n_gene)

    # ---- stage 3: graph propagation, adj streamed in column blocks -------------------------
    stacked = jnp.concatenate([mu_ori, logvar], axis=0)   # (2B, n_gene): tiny wrapper concat
    tc = _pick_col_block(n_gene)
    mean, var, z = pl.pallas_call(
        functools.partial(_prop_kernel, B),
        out_shape=(jax.ShapeDtypeStruct((B, n_gene), f32),
                   jax.ShapeDtypeStruct((B, n_gene), f32),
                   jax.ShapeDtypeStruct((B, n_gene), f32)),
        grid=(n_gene // tc,),
        in_specs=[
            pl.BlockSpec((2 * B, n_gene), lambda j: (0, 0)),   # small; fetched once (revisit)
            pl.BlockSpec((n_gene, tc), lambda j: (0, j)),      # adj column slab, double-buffered
            pl.BlockSpec((B, tc), lambda j: (0, j)),
        ],
        out_specs=(pl.BlockSpec((B, tc), lambda j: (0, j)),
                   pl.BlockSpec((B, tc), lambda j: (0, j)),
                   pl.BlockSpec((B, tc), lambda j: (0, j))),
        compiler_params=pltpu.CompilerParams(
            dimension_semantics=("parallel",),                 # shards adj columns on v7x's 2 TCs
            vmem_limit_bytes=48 * 1024 * 1024),                # headroom vs v7x's 64 MiB physical
    )(stacked, adj, noise)

    return {"mean": mean, "var": var, "gaussian": z, "logits": logits,
            "prob_cat": prob, "categorical": cat, "mu_ori": mu_ori}


def init_params(key, n_gene, z_dim, y_dim, x_dim=1):
    """Deterministic PyTorch-style Linear init (U(-1/sqrt(fan_in), 1/sqrt(fan_in))).
    Weights stored in the orientation each kernel consumes (see stage comments)."""
    ks = jax.random.split(key, 7)

    def lin(k, fan_in, fan_out):
        bound = 1.0 / (fan_in ** 0.5)
        kw, kb = jax.random.split(k)
        w = jax.random.uniform(kw, (fan_in, fan_out), jnp.float32, -bound, bound)
        b = jax.random.uniform(kb, (1, fan_out), jnp.float32, -bound, bound)
        return w, b

    p = {}
    p["w1"], p["b1"] = lin(ks[0], n_gene, z_dim)           # Linear(n_gene, z_dim), (in,out)
    p["w2"], p["b2"] = lin(ks[1], z_dim, z_dim)            # Linear(z_dim, z_dim)
    p["wg"], p["bg"] = lin(ks[2], z_dim, y_dim)            # GumbelSoftmax logits
    w3, b3 = lin(ks[3], x_dim + y_dim, z_dim)              # Linear(x_dim+y_dim, z_dim)
    p["w3x"] = w3[:x_dim, :].T                             # (z_dim, 1): x column of W3
    p["w3y"] = w3[x_dim:, :]                               # (y_dim, z_dim): y rows of W3
    p["b3"] = b3                                           # (1, z_dim)
    w4, b4 = lin(ks[4], z_dim, z_dim)                      # Linear(z_dim, z_dim)
    p["w4t"] = w4.T                                        # (out, in): used as w4t @ h
    p["b4"] = b4.T                                         # (z_dim, 1) column
    wmu, bmu = lin(ks[5], z_dim, 1)                        # Gaussian.mu : Linear(z_dim, 1)
    wvar, bvar = lin(ks[6], z_dim, 1)                      # Gaussian.var: Linear(z_dim, 1)
    p["wmv"] = jnp.concatenate([wmu.T, wvar.T], axis=0)    # (2, z_dim); row0 = mu, row1 = logvar
    p["bmv"] = jnp.concatenate([bmu, bvar], axis=0)        # (2, 1)
    return p


if __name__ == "__main__":
    B, n_gene, z_dim, y_dim, x_dim = 2, 16, 32, 8, 1

    key = jax.random.PRNGKey(0)
    k_x, k_adj, k_u, k_n, k_p = jax.random.split(key, 5)

    x = jax.random.normal(k_x, (B, n_gene, x_dim), jnp.float32)
    adj = 0.1 * jax.random.normal(k_adj, (n_gene, n_gene), jnp.float32)
    u_gumbel = jax.random.uniform(k_u, (B, y_dim), jnp.float32)   # torch.rand equivalent
    noise = jax.random.normal(k_n, (B, n_gene), jnp.float32)      # torch.randn_like equivalent
    params = init_params(k_p, n_gene, z_dim, y_dim, x_dim)

    out = inference_net(x, adj, params, u_gumbel, noise, temperature=1.0)
    out = jax.block_until_ready(out)

    assert out["mean"].shape == (B, n_gene)
    assert out["var"].shape == (B, n_gene)
    assert out["gaussian"].shape == (B, n_gene)
    assert out["mu_ori"].shape == (B, n_gene)
    assert out["logits"].shape == (B, y_dim)
    assert out["prob_cat"].shape == (B, y_dim)
    assert out["categorical"].shape == (B, y_dim)
    for v in out.values():
        assert bool(jnp.all(jnp.isfinite(v)))
    assert bool(jnp.all(out["var"] > 0.0))
    print("KERNEL_OK")
</pallas_src>

<mosaic_0001>
module attributes {stable_mosaic.version = 11 : i64} {
  func.func @_qyx_kernel(%arg0: memref<2x16xf32, #tpu.memory_space<vmem>>, %arg1: memref<2x8xf32, #tpu.memory_space<vmem>>, %arg2: memref<16x32xf32, #tpu.memory_space<vmem>>, %arg3: memref<1x32xf32, #tpu.memory_space<vmem>>, %arg4: memref<32x32xf32, #tpu.memory_space<vmem>>, %arg5: memref<1x32xf32, #tpu.memory_space<vmem>>, %arg6: memref<32x8xf32, #tpu.memory_space<vmem>>, %arg7: memref<1x8xf32, #tpu.memory_space<vmem>>, %arg8: memref<8x32xf32, #tpu.memory_space<vmem>>, %arg9: memref<1x32xf32, #tpu.memory_space<vmem>>, %arg10: memref<2x8xf32, #tpu.memory_space<vmem>>, %arg11: memref<2x8xf32, #tpu.memory_space<vmem>>, %arg12: memref<2x8xf32, #tpu.memory_space<vmem>>, %arg13: memref<2x32xf32, #tpu.memory_space<vmem>>) attributes {dimension_semantics = [], scalar_prefetch = 0 : i64, scratch_operands = 0 : i64, tpu.core_type = #tpu.core_type<tc>} {
    %c0 = arith.constant 0 : index
    %c0_0 = arith.constant 0 : index
    %0 = vector.load %arg0[%c0, %c0_0] : memref<2x16xf32, #tpu.memory_space<vmem>>, vector<2x16xf32>
    %c0_1 = arith.constant 0 : index
    %c0_2 = arith.constant 0 : index
    %1 = vector.load %arg2[%c0_1, %c0_2] : memref<16x32xf32, #tpu.memory_space<vmem>>, vector<16x32xf32>
    %cst = arith.constant dense<0.000000e+00> : vector<2x32xf32>
    %2 = tpu.matmul %0, %1, %cst {dimension_numbers = #tpu.dot_dimension_numbers<[1], [0], [0], [1], [0, 0, 1, 1], [], []>} : vector<2x16xf32>, vector<16x32xf32>, vector<2x32xf32> -> vector<2x32xf32>
    %c0_3 = arith.constant 0 : index
    %c0_4 = arith.constant 0 : index
    %3 = vector.load %arg3[%c0_3, %c0_4] : memref<1x32xf32, #tpu.memory_space<vmem>>, vector<1x32xf32>
    %4 = vector.broadcast %3 : vector<1x32xf32> to vector<2x32xf32>
    %5 = arith.addf %2, %4 : vector<2x32xf32>
    %cst_5 = arith.constant 0.000000e+00 : f32
    %6 = vector.broadcast %cst_5 : f32 to vector<2x32xf32>
    %7 = arith.maximumf %5, %6 : vector<2x32xf32>
    %c0_6 = arith.constant 0 : index
    %c0_7 = arith.constant 0 : index
    %8 = vector.load %arg4[%c0_6, %c0_7] : memref<32x32xf32, #tpu.memory_space<vmem>>, vector<32x32xf32>
    %cst_8 = arith.constant dense<0.000000e+00> : vector<2x32xf32>
    %9 = tpu.matmul %7, %8, %cst_8 {dimension_numbers = #tpu.dot_dimension_numbers<[1], [0], [0], [1], [0, 0, 1, 1], [], []>} : vector<2x32xf32>, vector<32x32xf32>, vector<2x32xf32> -> vector<2x32xf32>
    %c0_9 = arith.constant 0 : index
    %c0_10 = arith.constant 0 : index
    %10 = vector.load %arg5[%c0_9, %c0_10] : memref<1x32xf32, #tpu.memory_space<vmem>>, vector<1x32xf32>
    %11 = vector.broadcast %10 : vector<1x32xf32> to vector<2x32xf32>
    %12 = arith.addf %9, %11 : vector<2x32xf32>
    %cst_11 = arith.constant 0.000000e+00 : f32
    %13 = vector.broadcast %cst_11 : f32 to vector<2x32xf32>
    %14 = arith.maximumf %12, %13 : vector<2x32xf32>
    %c0_12 = arith.constant 0 : index
    %c0_13 = arith.constant 0 : index
    %15 = vector.load %arg6[%c0_12, %c0_13] : memref<32x8xf32, #tpu.memory_space<vmem>>, vector<32x8xf32>
    %cst_14 = arith.constant dense<0.000000e+00> : vector<2x8xf32>
    %16 = tpu.matmul %14, %15, %cst_14 {dimension_numbers = #tpu.dot_dimension_numbers<[1], [0], [0], [1], [0, 0, 1, 1], [], []>} : vector<2x32xf32>, vector<32x8xf32>, vector<2x8xf32> -> vector<2x8xf32>
    %c0_15 = arith.constant 0 : index
    %c0_16 = arith.constant 0 : index
    %17 = vector.load %arg7[%c0_15, %c0_16] : memref<1x8xf32, #tpu.memory_space<vmem>>, vector<1x8xf32>
    %18 = vector.broadcast %17 : vector<1x8xf32> to vector<2x8xf32>
    %19 = arith.addf %16, %18 : vector<2x8xf32>
    %c0_17 = arith.constant 0 : index
    %c0_18 = arith.constant 0 : index
    %20 = vector.load %arg10[%c0_17, %c0_18] : memref<2x8xf32, #tpu.memory_space<vmem>>, vector<2x8xf32>
    tpu.vector_store %arg10[%c0_17, %c0_18], %19 {strides = array<i32>} : memref<2x8xf32, #tpu.memory_space<vmem>>, vector<2x8xf32>,
    %cst_19 = arith.constant dense<0xFF800000> : vector<2xf32>
    %21 = vector.multi_reduction <maximumf>, %19, %cst_19 [1] : vector<2x8xf32> to vector<2xf32>
    %22 = vector.shape_cast %21 : vector<2xf32> to vector<2x1xf32>
    %23 = vector.broadcast %22 : vector<2x1xf32> to vector<2x8xf32>
    %24 = arith.subf %19, %23 : vector<2x8xf32>
    %25 = math.exp %24 : vector<2x8xf32>
    %cst_20 = arith.constant dense<0.000000e+00> : vector<2xf32>
    %26 = vector.multi_reduction <add>, %25, %cst_20 [1] : vector<2x8xf32> to vector<2xf32>
    %27 = vector.shape_cast %26 : vector<2xf32> to vector<2x1xf32>
    %28 = tpu.reciprocal %27 {approx = true} : vector<2x1xf32> -> vector<2x1xf32>
    %29 = vector.broadcast %28 : vector<2x1xf32> to vector<2x8xf32>
    %30 = arith.mulf %25, %29 : vector<2x8xf32>
    %c0_21 = arith.constant 0 : index
    %c0_22 = arith.constant 0 : index
    %31 = vector.load %arg11[%c0_21, %c0_22] : memref<2x8xf32, #tpu.memory_space<vmem>>, vector<2x8xf32>
    tpu.vector_store %arg11[%c0_21, %c0_22], %30 {strides = array<i32>} : memref<2x8xf32, #tpu.memory_space<vmem>>, vector<2x8xf32>,
    %c0_23 = arith.constant 0 : index
    %c0_24 = arith.constant 0 : index
    %32 = vector.load %arg1[%c0_23, %c0_24] : memref<2x8xf32, #tpu.memory_space<vmem>>, vector<2x8xf32>
    %cst_25 = arith.constant 9.99999968E-21 : f32
    %33 = vector.broadcast %cst_25 : f32 to vector<2x8xf32>
    %34 = arith.addf %32, %33 : vector<2x8xf32>
    %35 = math.log %34 : vector<2x8xf32>
    %cst_26 = arith.constant 0.000000e+00 : f32
    %36 = vector.broadcast %cst_26 : f32 to vector<2x8xf32>
    %37 = arith.subf %36, %35 : vector<2x8xf32>
    %cst_27 = arith.constant 9.99999968E-21 : f32
    %38 = vector.broadcast %cst_27 : f32 to vector<2x8xf32>
    %39 = arith.addf %37, %38 : vector<2x8xf32>
    %40 = math.log %39 : vector<2x8xf32>
    %cst_28 = arith.constant 0.000000e+00 : f32
    %41 = vector.broadcast %cst_28 : f32 to vector<2x8xf32>
    %42 = arith.subf %41, %40 : vector<2x8xf32>
    %43 = arith.addf %19, %42 : vector<2x8xf32>
    %cst_29 = arith.constant 1.000000e+00 : f32
    %44 = vector.broadcast %cst_29 : f32 to vector<2x8xf32>
    %45 = arith.mulf %43, %44 : vector<2x8xf32>
    %cst_30 = arith.constant dense<0xFF800000> : vector<2xf32>
    %46 = vector.multi_reduction <maximumf>, %45, %cst_30 [1] : vector<2x8xf32> to vector<2xf32>
    %47 = vector.shape_cast %46 : vector<2xf32> to vector<2x1xf32>
    %48 = vector.broadcast %47 : vector<2x1xf32> to vector<2x8xf32>
    %49 = arith.subf %45, %48 : vector<2x8xf32>
    %50 = math.exp %49 : vector<2x8xf32>
    %cst_31 = arith.constant dense<0.000000e+00> : vector<2xf32>
    %51 = vector.multi_reduction <add>, %50, %cst_31 [1] : vector<2x8xf32> to vector<2xf32>
    %52 = vector.shape_cast %51 : vector<2xf32> to vector<2x1xf32>
    %53 = tpu.reciprocal %52 {approx = true} : vector<2x1xf32> -> vector<2x1xf32>
    %54 = vector.broadcast %53 : vector<2x1xf32> to vector<2x8xf32>
    %55 = arith.mulf %50, %54 : vector<2x8xf32>
    %c0_32 = arith.constant 0 : index
    %c0_33 = arith.constant 0 : index
    %56 = vector.load %arg12[%c0_32, %c0_33] : memref<2x8xf32, #tpu.memory_space<vmem>>, vector<2x8xf32>
    tpu.vector_store %arg12[%c0_32, %c0_33], %55 {strides = array<i32>} : memref<2x8xf32, #tpu.memory_space<vmem>>, vector<2x8xf32>,
    %c0_34 = arith.constant 0 : index
    %c0_35 = arith.constant 0 : index
    %57 = vector.load %arg8[%c0_34, %c0_35] : memref<8x32xf32, #tpu.memory_space<vmem>>, vector<8x32xf32>
    %cst_36 = arith.constant dense<0.000000e+00> : vector<2x32xf32>
    %58 = tpu.matmul %55, %57, %cst_36 {dimension_numbers = #tpu.dot_dimension_numbers<[1], [0], [0], [1], [0, 0, 1, 1], [], []>} : vector<2x8xf32>, vector<8x32xf32>, vector<2x32xf32> -> vector<2x32xf32>
    %c0_37 = arith.constant 0 : index
    %c0_38 = arith.constant 0 : index
    %59 = vector.load %arg9[%c0_37, %c0_38] : memref<1x32xf32, #tpu.memory_space<vmem>>, vector<1x32xf32>
    %60 = vector.broadcast %59 : vector<1x32xf32> to vector<2x32xf32>
    %61 = arith.addf %58, %60 : vector<2x32xf32>
    %c0_39 = arith.constant 0 : index
    %c0_40 = arith.constant 0 : index
    %62 = vector.load %arg13[%c0_39, %c0_40] : memref<2x32xf32, #tpu.memory_space<vmem>>, vector<2x32xf32>
    tpu.vector_store %arg13[%c0_39, %c0_40], %61 {strides = array<i32>} : memref<2x32xf32, #tpu.memory_space<vmem>>, vector<2x32xf32>,
    return
  }
}

</mosaic_0001>

<llo_original>
// kernel: tpu_custom_call.1
$region0: #{tpu_custom_call.1}
  #allocation0 [shape = 'u32[]', space=smem, size = 0x4, offset = 0x4, fixed_abs, tag = 'smem constant byte address 0x4 - core index']
  #allocation1 [shape = 'u32[144,128]{1,0:T(1,128)}', space=vmem, size = 0x12000, scoped, tag = 'internal scratch']
  %s0 = inlined_call_operand.vmem [shape: f32[2,16], index: 0, kind: input, shape index: {}]
  %s1 = inlined_call_operand.hbm [shape: f32[2,8], index: 1, kind: input, shape index: {}]
  %s2 = inlined_call_operand.hbm [shape: f32[16,32], index: 2, kind: input, shape index: {}]
  %s3 = inlined_call_operand.hbm [shape: f32[1,32], index: 3, kind: input, shape index: {}]
  %s4 = inlined_call_operand.vmem [shape: f32[32,32], index: 4, kind: input, shape index: {}]
  %s5 = inlined_call_operand.hbm [shape: f32[1,32], index: 5, kind: input, shape index: {}]
  %s6 = inlined_call_operand.vmem [shape: f32[32,8], index: 6, kind: input, shape index: {}]
  %s7 = inlined_call_operand.vmem [shape: f32[1,8], index: 7, kind: input, shape index: {}]
  %s8 = inlined_call_operand.vmem [shape: f32[8,32], index: 8, kind: input, shape index: {}]
  %s9 = inlined_call_operand.vmem [shape: f32[1,32], index: 9, kind: input, shape index: {}]
  %s10 = inlined_call_operand.hbm [shape: f32[2,8], index: 10, kind: output, shape index: {0}]
  %s11 = inlined_call_operand.hbm [shape: f32[2,8], index: 11, kind: output, shape index: {1}]
  %s12 = inlined_call_operand.hbm [shape: f32[2,8], index: 12, kind: output, shape index: {2}]
  %s13 = inlined_call_operand.hbm [shape: f32[2,32], index: 13, kind: output, shape index: {3}]
  %14 = xla_tuple %s10, %s11, %s12, %s13
  %s15 = sld [smem:[#allocation0]]
  $region90: #{tpu_custom_call.1} parent=0
    _
  %s17 = ssub.s32 1, %s15
  %s18 = scalar_select 0, %s17, %s15
  $region1: #{tpu_custom_call.1} parent=0
    #allocation2 [shape = 'u8[1024]{0}', space=vmem, size = 0x400, scoped, tag = 'input window, operand 1, single buffered']
    #allocation3 [shape = 's32[1]{0}', space=sflag, size = 0x4, scoped, tag = 'scoped memory for tpu_custom_call.1']
    #allocation4 [shape = 's32[1]{0}', space=sflag, size = 0x4, scoped, tag = 'scoped memory for tpu_custom_call.1']
    #allocation5 [shape = 'u8[8192]{0}', space=vmem, size = 0x2000, scoped, tag = 'input window, operand 2, single buffered']
    #allocation6 [shape = 's32[1]{0}', space=sflag, size = 0x4, scoped, tag = 'scoped memory for tpu_custom_call.1']
    #allocation7 [shape = 'u8[512]{0}', space=vmem, size = 0x400, scoped, tag = 'input window, operand 3, single buffered']
    #allocation8 [shape = 'u8[512]{0}', space=vmem, size = 0x400, scoped, tag = 'input window, operand 5, single buffered']
    #allocation9 [shape = 's32[1]{0}', space=sflag, size = 0x4, scoped, tag = 'scoped memory for tpu_custom_call.1']
    #allocation10 [shape = 'u8[1024]{0}', space=vmem, size = 0x400, scoped, tag = 'output window, operand 0, single buffered']
    #allocation11 [shape = 'u8[1024]{0}', space=vmem, size = 0x400, scoped, tag = 'output window, operand 1, single buffered']
    #allocation12 [shape = 's32[1]{0}', space=sflag, size = 0x4, scoped, tag = 'scoped memory for tpu_custom_call.1']
    #allocation13 [shape = 'u8[1024]{0}', space=vmem, size = 0x400, scoped, tag = 'output window, operand 2, single buffered']
    #allocation14 [shape = 'u8[1024]{0}', space=vmem, size = 0x400, scoped, tag = 'output window, operand 3, single buffered']
    #allocation15 [shape = 's32[1]{0}', space=sflag, size = 0x4, scoped, tag = 'scoped memory for tpu_custom_call.1']
    %19 = vsyncpa [#allocation3], 0
    %20 = vsyncpa [#allocation6], 0
    %21 = vsyncpa [#allocation9], 0
    %22 = vsyncpa [#allocation4], 0
    %23 = vsyncpa [#allocation12], 0
    %24 = vsyncpa [#allocation15], 0
    // Predicated region
    $region2: #{tpu_custom_call.1} parent=1 // pred_check
      _
    $region3: #{tpu_custom_call.1} parent=1 // pred_check_branch
      %26 = sbr.rel (0) target = $region5
    $region4: #{tpu_custom_call.1} parent=1 // pred_region
      _
    $region5: #{tpu_custom_call.1} parent=1 // pred_fallthru
      _
    // Predicated region
    $region6: #{tpu_custom_call.1} parent=1 // pred_check
      _
    $region7: #{tpu_custom_call.1} parent=1 // pred_check_branch
      %28 = sbr.rel (0) target = $region9
    $region8: #{tpu_custom_call.1} parent=1 // pred_region
      %s30 = ssub.s32 32, 32
      %31 = vsyncadd [#allocation3], %s30
      %s33 = sshll.u32 [#allocation2], 4
      %s34 = int_to_ptr.vmem [resolvable:$true] %s33
      %36 = dma.hbm_to_vmem [thread:$0]  %s1, 32, %s34, [#allocation3]
    $region9: #{tpu_custom_call.1} parent=1 // pred_fallthru
      _
    // Predicated region
    $region10: #{tpu_custom_call.1} parent=1 // pred_check
      _
    $region11: #{tpu_custom_call.1} parent=1 // pred_check_branch
      %38 = sbr.rel (0) target = $region13
    $region12: #{tpu_custom_call.1} parent=1 // pred_region
      %s40 = ssub.s32 256, 256
      %41 = vsyncadd [#allocation6], %s40
      %s42 = sshll.u32 [#allocation5], 4
      %s43 = int_to_ptr.vmem [resolvable:$true] %s42
      %48 = dma.hbm_to_vmem [thread:$0]  %s2, 256, %s43, [#allocation6], 128, 128, 8
    $region13: #{tpu_custom_call.1} parent=1 // pred_fallthru
      _
    // Predicated region
    $region14: #{tpu_custom_call.1} parent=1 // pred_check
      _
    $region15: #{tpu_custom_call.1} parent=1 // pred_check_branch
      %50 = sbr.rel (0) target = $region17
    $region16: #{tpu_custom_call.1} parent=1 // pred_region
      %s52 = ssub.s32 16, 16
      %53 = vsyncadd [#allocation6], %s52
      %s55 = sshll.u32 [#allocation7], 4
      %s56 = int_to_ptr.vmem [resolvable:$true] %s55
      %58 = dma.hbm_to_vmem [thread:$0]  %s3, 16, %s56, [#allocation6]
    $region17: #{tpu_custom_call.1} parent=1 // pred_fallthru
      _
    // Predicated region
    $region18: #{tpu_custom_call.1} parent=1 // pred_check
      _
    $region19: #{tpu_custom_call.1} parent=1 // pred_check_branch
      %60 = sbr.rel (0) target = $region21
    $region20: #{tpu_custom_call.1} parent=1 // pred_region
      _
    $region21: #{tpu_custom_call.1} parent=1 // pred_fallthru
      _
    // Predicated region
    $region22: #{tpu_custom_call.1} parent=1 // pred_check
      _
    $region23: #{tpu_custom_call.1} parent=1 // pred_check_branch
      %62 = sbr.rel (0) target = $region25
    $region24: #{tpu_custom_call.1} parent=1 // pred_region
      %s64 = ssub.s32 16, 16
      %65 = vsyncadd [#allocation9], %s64
      %s67 = sshll.u32 [#allocation8], 4
      %s68 = int_to_ptr.vmem [resolvable:$true] %s67
      %70 = dma.hbm_to_vmem [thread:$0]  %s5, 16, %s68, [#allocation9]
    $region25: #{tpu_custom_call.1} parent=1 // pred_fallthru
      _
    // Predicated region
    $region26: #{tpu_custom_call.1} parent=1 // pred_check
      _
    $region27: #{tpu_custom_call.1} parent=1 // pred_check_branch
      %72 = sbr.rel (0) target = $region29
    $region28: #{tpu_custom_call.1} parent=1 // pred_region
      _
    $region29: #{tpu_custom_call.1} parent=1 // pred_fallthru
      _
    // Predicated region
    $region30: #{tpu_custom_call.1} parent=1 // pred_check
      _
    $region31: #{tpu_custom_call.1} parent=1 // pred_check_branch
      %74 = sbr.rel (0) target = $region33
    $region32: #{tpu_custom_call.1} parent=1 // pred_region
      _
    $region33: #{tpu_custom_call.1} parent=1 // pred_fallthru
      _
    // Predicated region
    $region34: #{tpu_custom_call.1} parent=1 // pred_check
      _
    $region35: #{tpu_custom_call.1} parent=1 // pred_check_branch
      %76 = sbr.rel (0) target = $region37
    $region36: #{tpu_custom_call.1} parent=1 // pred_region
      _
    $region37: #{tpu_custom_call.1} parent=1 // pred_fallthru
      _
    // Predicated region
    $region38: #{tpu_custom_call.1} parent=1 // pred_check
      _
    $region39: #{tpu_custom_call.1} parent=1 // pred_check_branch
      %78 = sbr.rel (0) target = $region41
    $region40: #{tpu_custom_call.1} parent=1 // pred_region
      _
    $region41: #{tpu_custom_call.1} parent=1 // pred_fallthru
      _
    // Predicated region
    $region42: #{tpu_custom_call.1} parent=1 // pred_check
      _
    $region43: #{tpu_custom_call.1} parent=1 // pred_check_branch
      %80 = sbr.rel (0) target = $region45
    $region44: #{tpu_custom_call.1} parent=1 // pred_region
      %81 = dma.done [#allocation3], 32
    $region45: #{tpu_custom_call.1} parent=1 // pred_fallthru
      _
    // Predicated region
    $region46: #{tpu_custom_call.1} parent=1 // pred_check
      _
    $region47: #{tpu_custom_call.1} parent=1 // pred_check_branch
      %83 = sbr.rel (0) target = $region49
    $region48: #{tpu_custom_call.1} parent=1 // pred_region
      %84 = dma.done [#allocation6], 256
    $region49: #{tpu_custom_call.1} parent=1 // pred_fallthru
      _
    // Predicated region
    $region50: #{tpu_custom_call.1} parent=1 // pred_check
      _
    $region51: #{tpu_custom_call.1} parent=1 // pred_check_branch
      %86 = sbr.rel (0) target = $region53
    $region52: #{tpu_custom_call.1} parent=1 // pred_region
      %87 = dma.done [#allocation6], 16
    $region53: #{tpu_custom_call.1} parent=1 // pred_fallthru
      _
    // Predicated region
    $region54: #{tpu_custom_call.1} parent=1 // pred_check
      _
    $region55: #{tpu_custom_call.1} parent=1 // pred_check_branch
      %89 = sbr.rel (0) target = $region57
    $region56: #{tpu_custom_call.1} parent=1 // pred_region
      %90 = dma.done [#allocation9], 16
    $region57: #{tpu_custom_call.1} parent=1 // pred_fallthru
      _
    %v91 = vld [vmem:[%s0] sm:$0x3]
    %v92 = vld [vmem:[#allocation5] sm:$0xff]
    %v93 = vld [vmem:[#allocation5 + $0x8] sm:$0xff]
    %v94 = vld [vmem:[#allocation7] sm:$0x1]
    %v96 = vlaneseq
    %v97 = vshrl.u32 %v96, 7
    %v98 = vsub.s32 0, %v97
    %v99 = vrot.slane %v94, %v98
    %vm101 = vcmask 130048
    %v103 = vsel %vm101, %v91, 0
    %105 = vmatprep.subr.mxu0 0.0
    %106 = vmatpush1.msra.mxu0 0.0
    %107 = vmatprep.subr.mxu0 0.0
    %108 = vmatpush1.msra.mxu0 0.0
    %109 = vmatprep.subr.mxu0 0.0
    %110 = vmatpush1.msra.mxu0 0.0
    %111 = vmatprep.subr.mxu0 0.0
    %112 = vmatpush1.msra.mxu0 0.0
    %113 = vmatprep.subr.mxu0 0.0
    %114 = vmatpush1.msra.mxu0 0.0
    %115 = vmatprep.subr.mxu0 0.0
    %116 = vmatpush1.msra.mxu0 0.0
    %117 = vmatprep.subr.mxu0 0.0
    %118 = vmatpush1.msra.mxu0 0.0
    %119 = vmatprep.subr.mxu0 0.0
    %120 = vmatpush1.msra.mxu0 0.0
    %121 = vmatprep.subr.mxu0 0.0
    %122 = vmatpush1.msra.mxu0 0.0
    %123 = vmatprep.subr.mxu0 0.0
    %124 = vmatpush1.msra.mxu0 0.0
    %125 = vmatprep.subr.mxu0 0.0
    %126 = vmatpush1.msra.mxu0 0.0
    %127 = vmatprep.subr.mxu0 0.0
    %128 = vmatpush1.msra.mxu0 0.0
    %129 = vmatprep.subr.mxu0 0.0
    %130 = vmatpush1.msra.mxu0 0.0
    %131 = vmatprep.subr.mxu0 0.0
    %132 = vmatpush1.msra.mxu0 0.0
    %133 = vmatprep.subr.mxu0 0.0
    %134 = vmatpush1.msra.mxu0 %v93
    %135 = vmatprep.subr.mxu0 0.0
    %136 = vmatpush1.msra.mxu0 %v92
    %137 = vmatprep.subr.mxu0 0.0
    %138 = vmatpush2.msra.mxu0 0.0
    %139 = vmatprep.subr.mxu0 0.0
    %140 = vmatpush2.msra.mxu0 0.0
    %141 = vmatprep.subr.mxu0 0.0
    %142 = vmatpush2.msra.mxu0 0.0
    %143 = vmatprep.subr.mxu0 0.0
    %144 = vmatpush2.msra.mxu0 0.0
    %145 = vmatprep.subr.mxu0 0.0
    %146 = vmatpush2.msra.mxu0 0.0
    %147 = vmatprep.subr.mxu0 0.0
    %148 = vmatpush2.msra.mxu0 0.0
    %149 = vmatprep.subr.mxu0 0.0
    %150 = vmatpush2.msra.mxu0 0.0
    %151 = vmatprep.subr.mxu0 0.0
    %152 = vmatpush2.msra.mxu0 0.0
    %153 = vmatprep.subr.mxu0 0.0
    %154 = vmatpush2.msra.mxu0 0.0
    %155 = vmatprep.subr.mxu0 0.0
    %156 = vmatpush2.msra.mxu0 0.0
    %157 = vmatprep.subr.mxu0 0.0
    %158 = vmatpush2.msra.mxu0 0.0
    %159 = vmatprep.subr.mxu0 0.0
    %160 = vmatpush2.msra.mxu0 0.0
    %161 = vmatprep.subr.mxu0 0.0
    %162 = vmatpush2.msra.mxu0 0.0
    %163 = vmatprep.subr.mxu0 0.0
    %164 = vmatpush2.msra.mxu0 0.0
    %165 = vmatprep.subr.mxu0 0.0
    %166 = vmatpush2.msra.mxu0 0.0
    %167 = vmatprep.subr.mxu0 0.0
    %168 = vmatpush2.msra.mxu0 0.0
    %169 = vmatprep.mubr.f32.mxu0 0.0
    %170 = vmatmul.mubr.f32.gmra.mxu0 %v103
    %v171 = vpop.f32.mrf.mxu0
    %v172 = vadd.f32 %v99, %v171
    %v173 = vpop.f32.mrf.mxu0
    %174 = vdwg.mxu0
    %v175 = vmax.f32 %v172, 0.0
    %v176 = vld [vmem:[%s4] sm:$0xff]
    %v177 = vld [vmem:[%s4 + $0x8] sm:$0xff]
    %v178 = vld [vmem:[%s4 + $0x10] sm:$0xff]
    %v179 = vld [vmem:[%s4 + $0x18] sm:$0xff]
    %v180 = vld [vmem:[#allocation8] sm:$0x1]
    %v182 = vlaneseq
    %v183 = vshrl.u32 %v182, 7
    %v184 = vsub.s32 0, %v183
    %v185 = vrot.slane %v180, %v184
    %vm187 = vcmask 261120
    %v189 = vsel %vm187, %v175, 0
    %191 = vmatprep.subr.mxu0 0.0
    %192 = vmatpush1.msra.mxu0 0.0
    %193 = vmatprep.subr.mxu0 0.0
    %194 = vmatpush1.msra.mxu0 0.0
    %195 = vmatprep.subr.mxu0 0.0
    %196 = vmatpush1.msra.mxu0 0.0
    %197 = vmatprep.subr.mxu0 0.0
    %198 = vmatpush1.msra.mxu0 0.0
    %199 = vmatprep.subr.mxu0 0.0
    %200 = vmatpush1.msra.mxu0 0.0
    %201 = vmatprep.subr.mxu0 0.0
    %202 = vmatpush1.msra.mxu0 0.0
    %203 = vmatprep.subr.mxu0 0.0
    %204 = vmatpush1.msra.mxu0 0.0
    %205 = vmatprep.subr.mxu0 0.0
    %206 = vmatpush1.msra.mxu0 0.0
    %207 = vmatprep.subr.mxu0 0.0
    %208 = vmatpush1.msra.mxu0 0.0
    %209 = vmatprep.subr.mxu0 0.0
    %210 = vmatpush1.msra.mxu0 0.0
    %211 = vmatprep.subr.mxu0 0.0
    %212 = vmatpush1.msra.mxu0 0.0
    %213 = vmatprep.subr.mxu0 0.0
    %214 = vmatpush1.msra.mxu0 0.0
    %215 = vmatprep.subr.mxu0 0.0
    %216 = vmatpush1.msra.mxu0 %v179
    %217 = vmatprep.subr.mxu0 0.0
    %218 = vmatpush1.msra.mxu0 %v178
    %219 = vmatprep.subr.mxu0 0.0
    %220 = vmatpush1.msra.mxu0 %v177
    %221 = vmatprep.subr.mxu0 0.0
    %222 = vmatpush1.msra.mxu0 %v176
    %223 = vmatprep.subr.mxu0 0.0
    %224 = vmatpush2.msra.mxu0 0.0
    %225 = vmatprep.subr.mxu0 0.0
    %226 = vmatpush2.msra.mxu0 0.0
    %227 = vmatprep.subr.mxu0 0.0
    %228 = vmatpush2.msra.mxu0 0.0
    %229 = vmatprep.subr.mxu0 0.0
    %230 = vmatpush2.msra.mxu0 0.0
    %231 = vmatprep.subr.mxu0 0.0
    %232 = vmatpush2.msra.mxu0 0.0
    %233 = vmatprep.subr.mxu0 0.0
    %234 = vmatpush2.msra.mxu0 0.0
    %235 = vmatprep.subr.mxu0 0.0
    %236 = vmatpush2.msra.mxu0 0.0
    %237 = vmatprep.subr.mxu0 0.0
    %238 = vmatpush2.msra.mxu0 0.0
    %239 = vmatprep.subr.mxu0 0.0
    %240 = vmatpush2.msra.mxu0 0.0
    %241 = vmatprep.subr.mxu0 0.0
    %242 = vmatpush2.msra.mxu0 0.0
    %243 = vmatprep.subr.mxu0 0.0
    %244 = vmatpush2.msra.mxu0 0.0
    %245 = vmatprep.subr.mxu0 0.0
    %246 = vmatpush2.msra.mxu0 0.0
    %247 = vmatprep.subr.mxu0 0.0
    %248 = vmatpush2.msra.mxu0 0.0
    %249 = vmatprep.subr.mxu0 0.0
    %250 = vmatpush2.msra.mxu0 0.0
    %251 = vmatprep.subr.mxu0 0.0
    %252 = vmatpush2.msra.mxu0 0.0
    %253 = vmatprep.subr.mxu0 0.0
    %254 = vmatpush2.msra.mxu0 0.0
    %255 = vmatprep.mubr.f32.mxu0 0.0
    %256 = vmatmul.mubr.f32.gmra.mxu0 %v189
    %v257 = vpop.f32.mrf.mxu0
    %v258 = vadd.f32 %v185, %v257
    %v259 = vpop.f32.mrf.mxu0
    %260 = vdwg.mxu0
    %v261 = vmax.f32 %v258, 0.0
    %v262 = vld [vmem:[%s6] sm:$0xff]
    %v263 = vld [vmem:[%s6 + $0x8] sm:$0xff]
    %v264 = vld [vmem:[%s6 + $0x10] sm:$0xff]
    %v265 = vld [vmem:[%s6 + $0x18] sm:$0xff]
    %v266 = vld [vmem:[%s7] sm:$0x1]
    %v268 = vlaneseq
    %v269 = vshrl.u32 %v268, 7
    %v270 = vsub.s32 0, %v269
    %v271 = vrot.slane %v266, %v270
    %v274 = vsel %vm187, %v261, 0
    %276 = vmatprep.subr.mxu0 0.0
    %277 = vmatpush1.msra.mxu0 0.0
    %278 = vmatprep.subr.mxu0 0.0
    %279 = vmatpush1.msra.mxu0 0.0
    %280 = vmatprep.subr.mxu0 0.0
    %281 = vmatpush1.msra.mxu0 0.0
    %282 = vmatprep.subr.mxu0 0.0
    %283 = vmatpush1.msra.mxu0 0.0
    %284 = vmatprep.subr.mxu0 0.0
    %285 = vmatpush1.msra.mxu0 0.0
    %286 = vmatprep.subr.mxu0 0.0
    %287 = vmatpush1.msra.mxu0 0.0
    %288 = vmatprep.subr.mxu0 0.0
    %289 = vmatpush1.msra.mxu0 0.0
    %290 = vmatprep.subr.mxu0 0.0
    %291 = vmatpush1.msra.mxu0 0.0
    %292 = vmatprep.subr.mxu0 0.0
    %293 = vmatpush1.msra.mxu0 0.0
    %294 = vmatprep.subr.mxu0 0.0
    %295 = vmatpush1.msra.mxu0 0.0
    %296 = vmatprep.subr.mxu0 0.0
    %297 = vmatpush1.msra.mxu0 0.0
    %298 = vmatprep.subr.mxu0 0.0
    %299 = vmatpush1.msra.mxu0 0.0
    %300 = vmatprep.subr.mxu0 0.0
    %301 = vmatpush1.msra.mxu0 %v265
    %302 = vmatprep.subr.mxu0 0.0
    %303 = vmatpush1.msra.mxu0 %v264
    %304 = vmatprep.subr.mxu0 0.0
    %305 = vmatpush1.msra.mxu0 %v263
    %306 = vmatprep.subr.mxu0 0.0
    %307 = vmatpush1.msra.mxu0 %v262
    %308 = vmatprep.subr.mxu0 0.0
    %309 = vmatpush2.msra.mxu0 0.0
    %310 = vmatprep.subr.mxu0 0.0
    %311 = vmatpush2.msra.mxu0 0.0
    %312 = vmatprep.subr.mxu0 0.0
    %313 = vmatpush2.msra.mxu0 0.0
    %314 = vmatprep.subr.mxu0 0.0
    %315 = vmatpush2.msra.mxu0 0.0
    %316 = vmatprep.subr.mxu0 0.0
    %317 = vmatpush2.msra.mxu0 0.0
    %318 = vmatprep.subr.mxu0 0.0
    %319 = vmatpush2.msra.mxu0 0.0
    %320 = vmatprep.subr.mxu0 0.0
    %321 = vmatpush2.msra.mxu0 0.0
    %322 = vmatprep.subr.mxu0 0.0
    %323 = vmatpush2.msra.mxu0 0.0
    %324 = vmatprep.subr.mxu0 0.0
    %325 = vmatpush2.msra.mxu0 0.0
    %326 = vmatprep.subr.mxu0 0.0
    %327 = vmatpush2.msra.mxu0 0.0
    %328 = vmatprep.subr.mxu0 0.0
    %329 = vmatpush2.msra.mxu0 0.0
    %330 = vmatprep.subr.mxu0 0.0
    %331 = vmatpush2.msra.mxu0 0.0
    %332 = vmatprep.subr.mxu0 0.0
    %333 = vmatpush2.msra.mxu0 0.0
    %334 = vmatprep.subr.mxu0 0.0
    %335 = vmatpush2.msra.mxu0 0.0
    %336 = vmatprep.subr.mxu0 0.0
    %337 = vmatpush2.msra.mxu0 0.0
    %338 = vmatprep.subr.mxu0 0.0
    %339 = vmatpush2.msra.mxu0 0.0
    %340 = vmatprep.mubr.f32.mxu0 0.0
    %341 = vmatmul.mubr.f32.gmra.mxu0 %v274
    %v342 = vpop.f32.mrf.mxu0
    %v343 = vadd.f32 %v271, %v342
    %v344 = vpop.f32.mrf.mxu0
    %345 = vdwg.mxu0
    %vm346 = vcmask 58368
    %347 = vst.msk [vmem:[#allocation10] sm:$0x3] %vm346, %v343
    %v348 = vsel %vm346, %v343, -inf
    %349 = vmax.xlane.f32.xlu0 %v348
    %v350 = vpop.xlane.xlu0 %349
    %v351 = vsub.f32 %v343, %v350
    %v352 = vmul.f32 %v351, 1.442695
    %v353 = vpow.pop %v352
    %v354 = vsel %vm346, %v353, 0.0
    %355 = vadd.xlane.f32.xlu0 %v354
    %v356 = vpop.xlane.xlu0 %355
    %v357 = vrcp.pop %v356
    %v358 = vmul.f32 %v353, %v357
    %359 = vst.msk [vmem:[#allocation11] sm:$0x3] %vm346, %v358
    %v360 = vld [vmem:[#allocation2] sm:$0x3]
    %v361 = vadd.f32 %v360, 1e-20
    %v362 = vlog2.pop %v361
    %v363 = vmul.f32 %v362, 0.6931472
    %v364 = vsub.f32 0.0, %v363
    %v365 = vadd.f32 %v364, 1e-20
    %v366 = vlog2.pop %v365
    %v367 = vmul.f32 %v366, 0.6931472
    %v368 = vsub.f32 0.0, %v367
    %v369 = vadd.f32 %v343, %v368
    %v370 = vsel %vm346, %v369, -inf
    %371 = vmax.xlane.f32.xlu0 %v370
    %v372 = vpop.xlane.xlu0 %371
    %v373 = vsub.f32 %v369, %v372
    %v374 = vmul.f32 %v373, 1.442695
    %v375 = vpow.pop %v374
    %v376 = vsel %vm346, %v375, 0.0
    %377 = vadd.xlane.f32.xlu0 %v376
    %v378 = vpop.xlane.xlu0 %377
    %v379 = vrcp.pop %v378
    %v380 = vmul.f32 %v375, %v379
    %381 = vst.msk [vmem:[#allocation13] sm:$0x3] %vm346, %v380
    %v382 = vld [vmem:[%s8] sm:$0xff]
    %v383 = vld [vmem:[%s9] sm:$0x1]
    %v385 = vlaneseq
    %v386 = vshrl.u32 %v385, 7
    %v387 = vsub.s32 0, %v386
    %v388 = vrot.slane %v383, %v387
    %vm390 = vcmask 64512
    %v392 = vsel %vm390, %v380, 0
    %394 = vmatprep.subr.mxu0 0.0
    %395 = vmatpush1.msra.mxu0 0.0
    %396 = vmatprep.subr.mxu0 0.0
    %397 = vmatpush1.msra.mxu0 0.0
    %398 = vmatprep.subr.mxu0 0.0
    %399 = vmatpush1.msra.mxu0 0.0
    %400 = vmatprep.subr.mxu0 0.0
    %401 = vmatpush1.msra.mxu0 0.0
    %402 = vmatprep.subr.mxu0 0.0
    %403 = vmatpush1.msra.mxu0 0.0
    %404 = vmatprep.subr.mxu0 0.0
    %405 = vmatpush1.msra.mxu0 0.0
    %406 = vmatprep.subr.mxu0 0.0
    %407 = vmatpush1.msra.mxu0 0.0
    %408 = vmatprep.subr.mxu0 0.0
    %409 = vmatpush1.msra.mxu0 0.0
    %410 = vmatprep.subr.mxu0 0.0
    %411 = vmatpush1.msra.mxu0 0.0
    %412 = vmatprep.subr.mxu0 0.0
    %413 = vmatpush1.msra.mxu0 0.0
    %414 = vmatprep.subr.mxu0 0.0
    %415 = vmatpush1.msra.mxu0 0.0
    %416 = vmatprep.subr.mxu0 0.0
    %417 = vmatpush1.msra.mxu0 0.0
    %418 = vmatprep.subr.mxu0 0.0
    %419 = vmatpush1.msra.mxu0 0.0
    %420 = vmatprep.subr.mxu0 0.0
    %421 = vmatpush1.msra.mxu0 0.0
    %422 = vmatprep.subr.mxu0 0.0
    %423 = vmatpush1.msra.mxu0 0.0
    %424 = vmatprep.subr.mxu0 0.0
    %425 = vmatpush1.msra.mxu0 %v382
    %426 = vmatprep.subr.mxu0 0.0
    %427 = vmatpush2.msra.mxu0 0.0
    %428 = vmatprep.subr.mxu0 0.0
    %429 = vmatpush2.msra.mxu0 0.0
    %430 = vmatprep.subr.mxu0 0.0
    %431 = vmatpush2.msra.mxu0 0.0
    %432 = vmatprep.subr.mxu0 0.0
    %433 = vmatpush2.msra.mxu0 0.0
    %434 = vmatprep.subr.mxu0 0.0
    %435 = vmatpush2.msra.mxu0 0.0
    %436 = vmatprep.subr.mxu0 0.0
    %437 = vmatpush2.msra.mxu0 0.0
    %438 = vmatprep.subr.mxu0 0.0
    %439 = vmatpush2.msra.mxu0 0.0
    %440 = vmatprep.subr.mxu0 0.0
    %441 = vmatpush2.msra.mxu0 0.0
    %442 = vmatprep.subr.mxu0 0.0
    %443 = vmatpush2.msra.mxu0 0.0
    %444 = vmatprep.subr.mxu0 0.0
    %445 = vmatpush2.msra.mxu0 0.0
    %446 = vmatprep.subr.mxu0 0.0
    %447 = vmatpush2.msra.mxu0 0.0
    %448 = vmatprep.subr.mxu0 0.0
    %449 = vmatpush2.msra.mxu0 0.0
    %450 = vmatprep.subr.mxu0 0.0
    %451 = vmatpush2.msra.mxu0 0.0
    %452 = vmatprep.subr.mxu0 0.0
    %453 = vmatpush2.msra.mxu0 0.0
    %454 = vmatprep.subr.mxu0 0.0
    %455 = vmatpush2.msra.mxu0 0.0
    %456 = vmatprep.subr.mxu0 0.0
    %457 = vmatpush2.msra.mxu0 0.0
    %458 = vmatprep.mubr.f32.mxu0 0.0
    %459 = vmatmul.mubr.f32.gmra.mxu0 %v392
    %v460 = vpop.f32.mrf.mxu0
    %v461 = vadd.f32 %v388, %v460
    %v462 = vpop.f32.mrf.mxu0
    %463 = vdwg.mxu0
    %vm464 = vcmask 254976
    %465 = vst.msk [vmem:[#allocation14] sm:$0x3] %vm464, %v461
    // Predicated region
    $region58: #{tpu_custom_call.1} parent=1 // pred_check
      _
    $region59: #{tpu_custom_call.1} parent=1 // pred_check_branch
      %467 = sbr.rel (0) target = $region61
    $region60: #{tpu_custom_call.1} parent=1 // pred_region
      %s469 = ssub.s32 32, 32
      %470 = vsyncadd [#allocation4], %s469
      %s472 = sshll.u32 [#allocation10], 4
      %s473 = int_to_ptr.vmem [resolvable:$true] %s472
      %475 = dma.vmem_to_hbm [thread:$0]  %s473, 32, %s10, [#allocation4]
    $region61: #{tpu_custom_call.1} parent=1 // pred_fallthru
      _
    // Predicated region
    $region62: #{tpu_custom_call.1} parent=1 // pred_check
      _
    $region63: #{tpu_custom_call.1} parent=1 // pred_check_branch
      %477 = sbr.rel (0) target = $region65
    $region64: #{tpu_custom_call.1} parent=1 // pred_region
      %s479 = ssub.s32 32, 32
      %480 = vsyncadd [#allocation12], %s479
      %s482 = sshll.u32 [#allocation11], 4
      %s483 = int_to_ptr.vmem [resolvable:$true] %s482
      %485 = dma.vmem_to_hbm [thread:$0]  %s483, 32, %s11, [#allocation12]
    $region65: #{tpu_custom_call.1} parent=1 // pred_fallthru
      _
    // Predicated region
    $region66: #{tpu_custom_call.1} parent=1 // pred_check
      _
    $region67: #{tpu_custom_call.1} parent=1 // pred_check_branch
      %487 = sbr.rel (0) target = $region69
    $region68: #{tpu_custom_call.1} parent=1 // pred_region
      %s489 = ssub.s32 32, 32
      %490 = vsyncadd [#allocation12], %s489
      %s492 = sshll.u32 [#allocation13], 4
      %s493 = int_to_ptr.vmem [resolvable:$true] %s492
      %495 = dma.vmem_to_hbm [thread:$0]  %s493, 32, %s12, [#allocation12]
    $region69: #{tpu_custom_call.1} parent=1 // pred_fallthru
      _
    // Predicated region
    $region70: #{tpu_custom_call.1} parent=1 // pred_check
      _
    $region71: #{tpu_custom_call.1} parent=1 // pred_check_branch
      %497 = sbr.rel (0) target = $region73
    $region72: #{tpu_custom_call.1} parent=1 // pred_region
      %s499 = ssub.s32 32, 32
      %500 = vsyncadd [#allocation15], %s499
      %s502 = sshll.u32 [#allocation14], 4
      %s503 = int_to_ptr.vmem [resolvable:$true] %s502
      %505 = dma.vmem_to_hbm [thread:$0]  %s503, 32, %s13, [#allocation15]
    $region73: #{tpu_custom_call.1} parent=1 // pred_fallthru
      _
    // Predicated region
    $region74: #{tpu_custom_call.1} parent=1 // pred_check
      _
    $region75: #{tpu_custom_call.1} parent=1 // pred_check_branch
      %507 = sbr.rel (0) target = $region77
    $region76: #{tpu_custom_call.1} parent=1 // pred_region
      %508 = dma.done [#allocation4], 32
    $region77: #{tpu_custom_call.1} parent=1 // pred_fallthru
      _
    // Predicated region
    $region78: #{tpu_custom_call.1} parent=1 // pred_check
      _
    $region79: #{tpu_custom_call.1} parent=1 // pred_check_branch
      %510 = sbr.rel (0) target = $region81
    $region80: #{tpu_custom_call.1} parent=1 // pred_region
      %511 = dma.done [#allocation12], 32
    $region81: #{tpu_custom_call.1} parent=1 // pred_fallthru
      _
    // Predicated region
    $region82: #{tpu_custom_call.1} parent=1 // pred_check
      _
    $region83: #{tpu_custom_call.1} parent=1 // pred_check_branch
      %513 = sbr.rel (0) target = $region85
    $region84: #{tpu_custom_call.1} parent=1 // pred_region
      %514 = dma.done [#allocation12], 32
    $region85: #{tpu_custom_call.1} parent=1 // pred_fallthru
      _
    // Predicated region
    $region86: #{tpu_custom_call.1} parent=1 // pred_check
      _
    $region87: #{tpu_custom_call.1} parent=1 // pred_check_branch
      %516 = sbr.rel (0) target = $region89
    $region88: #{tpu_custom_call.1} parent=1 // pred_region
      %517 = dma.done [#allocation15], 32
    $region89: #{tpu_custom_call.1} parent=1 // pred_fallthru
      _
    %518 = vsyncpa [#allocation3], 1
    %519 = vsyncpa [#allocation6], 1
    %520 = vsyncpa [#allocation9], 1
    %521 = vsyncpa [#allocation4], 1
    %522 = vsyncpa [#allocation12], 1
    %523 = vsyncpa [#allocation15], 1

</llo_original>
